<compile_context>
chip_gen: v5e
topology: v5e:2x2
jax: 0.10.0
libtpu: 0.0.40
codegen_flags: <defaults>
</compile_context>

<pallas_src>
import functools

import jax
import jax.numpy as jnp
from jax.experimental import pallas as pl
from jax.experimental.pallas import tpu as pltpu


def _outconv_vpu_kernel(w_ref, b_ref, x_ref, o_ref, *, c_in, c_out):
    """1x1 conv as a VPU broadcast-FMA over the pixel (lane) axis.

    w_ref : (C_out, C_in) f32, SMEM scalars
    b_ref : (C_out,)      f32, SMEM scalars
    x_ref : (C_in,  TM)   VMEM  (pixels on lanes -> lane-dense loads)
    o_ref : (C_out, TM)   VMEM  (pixels on lanes -> lane-dense stores)
    """
    for co in range(c_out):
        acc = x_ref[0:1, :].astype(jnp.float32) * w_ref[co, 0]
        for ci in range(1, c_in):
            acc = acc + x_ref[ci:ci + 1, :].astype(jnp.float32) * w_ref[co, ci]
        acc = acc + b_ref[co]
        o_ref[co:co + 1, :] = acc.astype(o_ref.dtype)


def outconv_pallas(x_nchw, weight, bias, *, tile_hw=1024):
    """Forward of nn.Conv2d(in_channels, out_channels, kernel_size=1).

    x_nchw : (N, C_in, H, W)
    weight : (C_out, C_in, 1, 1)   (PyTorch conv weight layout)
    bias   : (C_out,)
    returns: (N, C_out, H, W)
    """
    N, C_in, H, W = x_nchw.shape
    C_out = weight.shape[0]
    HW = H * W

    # Pixels-last layout: pure reshapes, no transposes / extra HBM round trips.
    x3 = x_nchw.reshape(N, C_in, HW)
    w_mat = weight.reshape(C_out, C_in).astype(jnp.float32)
    b_vec = bias.astype(jnp.float32)

    # Lane tile: full HW when small (always a legal full-dim block); otherwise a
    # 128-multiple tile, with a partial (masked) last block instead of an assert.
    tile = HW if HW <= tile_hw else tile_hw
    n_hw = pl.cdiv(HW, tile)

    kernel = functools.partial(_outconv_vpu_kernel, c_in=C_in, c_out=C_out)

    itemsize = jnp.dtype(x_nchw.dtype).itemsize
    cost = pl.CostEstimate(
        flops=2 * N * HW * C_in * C_out,
        transcendentals=0,
        bytes_accessed=(N * C_in * HW + N * C_out * HW) * itemsize
        + (C_out * C_in + C_out) * 4,
    )

    out3 = pl.pallas_call(
        kernel,
        out_shape=jax.ShapeDtypeStruct((N, C_out, HW), x_nchw.dtype),
        grid_spec=pltpu.PrefetchScalarGridSpec(
            num_scalar_prefetch=0,
            grid=(N, n_hw),  # batch + HW tiles both parallel -> feeds 2 TCs on v7x
            in_specs=[
                pl.BlockSpec(memory_space=pltpu.MemorySpace.SMEM),   # weight scalars
                pl.BlockSpec(memory_space=pltpu.MemorySpace.SMEM),   # bias scalars
                pl.BlockSpec((None, C_in, tile), lambda n, t: (n, 0, t)),
            ],
            out_specs=pl.BlockSpec((None, C_out, tile), lambda n, t: (n, 0, t)),
        ),
        compiler_params=pltpu.CompilerParams(
            dimension_semantics=("parallel", "parallel")),
        cost_estimate=cost,
    )(w_mat, b_vec, x3)

    return out3.reshape(N, C_out, H, W)


if __name__ == "__main__":
    key = jax.random.PRNGKey(0)
    k_x, k_w, k_b = jax.random.split(key, 3)

    N, C_in, C_out, H, W = 2, 4, 3, 16, 16

    x = jax.random.normal(k_x, (N, C_in, H, W), dtype=jnp.float32)

    # Deterministic param init mimicking nn.Conv2d default: U(-1/sqrt(fan_in), 1/sqrt(fan_in))
    fan_in = C_in * 1 * 1
    bound = 1.0 / (fan_in ** 0.5)
    weight = jax.random.uniform(k_w, (C_out, C_in, 1, 1), jnp.float32, -bound, bound)
    bias = jax.random.uniform(k_b, (C_out,), jnp.float32, -bound, bound)

    out = outconv_pallas(x, weight, bias)
    jax.block_until_ready(out)

    # Reference check (plain JAX einsum, same semantics as F.conv2d with k=1)
    ref = jnp.einsum("nchw,oc->nohw", x, weight.reshape(C_out, C_in)) + bias[None, :, None, None]
    assert out.shape == (N, C_out, H, W)
    assert jnp.allclose(out, ref, atol=1e-5, rtol=1e-5)

    print("KERNEL_OK")
</pallas_src>

<mosaic_0001>
module attributes {stable_mosaic.version = 11 : i64} {
  func.func @_outconv_vpu_kernel(%arg0: i32, %arg1: i32, %arg2: memref<3x4xf32, #tpu.memory_space<smem>>, %arg3: memref<3xf32, #tpu.memory_space<smem>>, %arg4: memref<1x4x256xf32, #tpu.memory_space<vmem>>, %arg5: memref<1x3x256xf32, #tpu.memory_space<vmem>>) attributes {dimension_semantics = [#tpu.dimension_semantics<parallel>, #tpu.dimension_semantics<parallel>], iteration_bounds = array<i64: 2, 1>, scalar_prefetch = 0 : i64, scratch_operands = 0 : i64, tpu.core_type = #tpu.core_type<tc>, window_params = [{transform_indices = @transform_0, window_bounds = array<i64: 3, 4>}, {transform_indices = @transform_1, window_bounds = array<i64: 3>}, {transform_indices = @transform_2, window_bounds = array<i64: 1, 4, 256>}, {transform_indices = @transform_3, window_bounds = array<i64: 1, 3, 256>}]} {
    %c0 = arith.constant 0 : index
    %c0_0 = arith.constant 0 : index
    %c0_1 = arith.constant 0 : index
    %0 = vector.load %arg4[%c0, %c0_0, %c0_1] : memref<1x4x256xf32, #tpu.memory_space<vmem>>, vector<1x1x256xf32>
    %1 = vector.shape_cast %0 : vector<1x1x256xf32> to vector<1x256xf32>
    %c0_2 = arith.constant 0 : index
    %c0_3 = arith.constant 0 : index
    %2 = memref.load %arg2[%c0_2, %c0_3] : memref<3x4xf32, #tpu.memory_space<smem>>
    %3 = vector.broadcast %2 : f32 to vector<1x256xf32>
    %4 = arith.mulf %1, %3 : vector<1x256xf32>
    %c0_4 = arith.constant 0 : index
    %c1 = arith.constant 1 : index
    %c0_5 = arith.constant 0 : index
    %5 = vector.load %arg4[%c0_4, %c1, %c0_5] : memref<1x4x256xf32, #tpu.memory_space<vmem>>, vector<1x1x256xf32>
    %6 = vector.shape_cast %5 : vector<1x1x256xf32> to vector<1x256xf32>
    %c0_6 = arith.constant 0 : index
    %c1_7 = arith.constant 1 : index
    %7 = memref.load %arg2[%c0_6, %c1_7] : memref<3x4xf32, #tpu.memory_space<smem>>
    %8 = vector.broadcast %7 : f32 to vector<1x256xf32>
    %9 = arith.mulf %6, %8 : vector<1x256xf32>
    %10 = arith.addf %4, %9 : vector<1x256xf32>
    %c0_8 = arith.constant 0 : index
    %c2 = arith.constant 2 : index
    %c0_9 = arith.constant 0 : index
    %11 = vector.load %arg4[%c0_8, %c2, %c0_9] : memref<1x4x256xf32, #tpu.memory_space<vmem>>, vector<1x1x256xf32>
    %12 = vector.shape_cast %11 : vector<1x1x256xf32> to vector<1x256xf32>
    %c0_10 = arith.constant 0 : index
    %c2_11 = arith.constant 2 : index
    %13 = memref.load %arg2[%c0_10, %c2_11] : memref<3x4xf32, #tpu.memory_space<smem>>
    %14 = vector.broadcast %13 : f32 to vector<1x256xf32>
    %15 = arith.mulf %12, %14 : vector<1x256xf32>
    %16 = arith.addf %10, %15 : vector<1x256xf32>
    %c0_12 = arith.constant 0 : index
    %c3 = arith.constant 3 : index
    %c0_13 = arith.constant 0 : index
    %17 = vector.load %arg4[%c0_12, %c3, %c0_13] : memref<1x4x256xf32, #tpu.memory_space<vmem>>, vector<1x1x256xf32>
    %18 = vector.shape_cast %17 : vector<1x1x256xf32> to vector<1x256xf32>
    %c0_14 = arith.constant 0 : index
    %c3_15 = arith.constant 3 : index
    %19 = memref.load %arg2[%c0_14, %c3_15] : memref<3x4xf32, #tpu.memory_space<smem>>
    %20 = vector.broadcast %19 : f32 to vector<1x256xf32>
    %21 = arith.mulf %18, %20 : vector<1x256xf32>
    %22 = arith.addf %16, %21 : vector<1x256xf32>
    %c0_16 = arith.constant 0 : index
    %23 = memref.load %arg3[%c0_16] : memref<3xf32, #tpu.memory_space<smem>>
    %24 = vector.broadcast %23 : f32 to vector<1x256xf32>
    %25 = arith.addf %22, %24 : vector<1x256xf32>
    %c0_17 = arith.constant 0 : index
    %c0_18 = arith.constant 0 : index
    %c0_19 = arith.constant 0 : index
    %26 = vector.load %arg5[%c0_17, %c0_18, %c0_19] : memref<1x3x256xf32, #tpu.memory_space<vmem>>, vector<1x1x256xf32>
    %27 = vector.shape_cast %26 : vector<1x1x256xf32> to vector<1x256xf32>
    %28 = vector.shape_cast %25 : vector<1x256xf32> to vector<1x1x256xf32>
    tpu.vector_store %arg5[%c0_17, %c0_18, %c0_19], %28 {strides = array<i32>} : memref<1x3x256xf32, #tpu.memory_space<vmem>>, vector<1x1x256xf32>,
    %c0_20 = arith.constant 0 : index
    %c0_21 = arith.constant 0 : index
    %c0_22 = arith.constant 0 : index
    %29 = vector.load %arg4[%c0_20, %c0_21, %c0_22] : memref<1x4x256xf32, #tpu.memory_space<vmem>>, vector<1x1x256xf32>
    %30 = vector.shape_cast %29 : vector<1x1x256xf32> to vector<1x256xf32>
    %c1_23 = arith.constant 1 : index
    %c0_24 = arith.constant 0 : index
    %31 = memref.load %arg2[%c1_23, %c0_24] : memref<3x4xf32, #tpu.memory_space<smem>>
    %32 = vector.broadcast %31 : f32 to vector<1x256xf32>
    %33 = arith.mulf %30, %32 : vector<1x256xf32>
    %c0_25 = arith.constant 0 : index
    %c1_26 = arith.constant 1 : index
    %c0_27 = arith.constant 0 : index
    %34 = vector.load %arg4[%c0_25, %c1_26, %c0_27] : memref<1x4x256xf32, #tpu.memory_space<vmem>>, vector<1x1x256xf32>
    %35 = vector.shape_cast %34 : vector<1x1x256xf32> to vector<1x256xf32>
    %c1_28 = arith.constant 1 : index
    %c1_29 = arith.constant 1 : index
    %36 = memref.load %arg2[%c1_28, %c1_29] : memref<3x4xf32, #tpu.memory_space<smem>>
    %37 = vector.broadcast %36 : f32 to vector<1x256xf32>
    %38 = arith.mulf %35, %37 : vector<1x256xf32>
    %39 = arith.addf %33, %38 : vector<1x256xf32>
    %c0_30 = arith.constant 0 : index
    %c2_31 = arith.constant 2 : index
    %c0_32 = arith.constant 0 : index
    %40 = vector.load %arg4[%c0_30, %c2_31, %c0_32] : memref<1x4x256xf32, #tpu.memory_space<vmem>>, vector<1x1x256xf32>
    %41 = vector.shape_cast %40 : vector<1x1x256xf32> to vector<1x256xf32>
    %c1_33 = arith.constant 1 : index
    %c2_34 = arith.constant 2 : index
    %42 = memref.load %arg2[%c1_33, %c2_34] : memref<3x4xf32, #tpu.memory_space<smem>>
    %43 = vector.broadcast %42 : f32 to vector<1x256xf32>
    %44 = arith.mulf %41, %43 : vector<1x256xf32>
    %45 = arith.addf %39, %44 : vector<1x256xf32>
    %c0_35 = arith.constant 0 : index
    %c3_36 = arith.constant 3 : index
    %c0_37 = arith.constant 0 : index
    %46 = vector.load %arg4[%c0_35, %c3_36, %c0_37] : memref<1x4x256xf32, #tpu.memory_space<vmem>>, vector<1x1x256xf32>
    %47 = vector.shape_cast %46 : vector<1x1x256xf32> to vector<1x256xf32>
    %c1_38 = arith.constant 1 : index
    %c3_39 = arith.constant 3 : index
    %48 = memref.load %arg2[%c1_38, %c3_39] : memref<3x4xf32, #tpu.memory_space<smem>>
    %49 = vector.broadcast %48 : f32 to vector<1x256xf32>
    %50 = arith.mulf %47, %49 : vector<1x256xf32>
    %51 = arith.addf %45, %50 : vector<1x256xf32>
    %c1_40 = arith.constant 1 : index
    %52 = memref.load %arg3[%c1_40] : memref<3xf32, #tpu.memory_space<smem>>
    %53 = vector.broadcast %52 : f32 to vector<1x256xf32>
    %54 = arith.addf %51, %53 : vector<1x256xf32>
    %c0_41 = arith.constant 0 : index
    %c1_42 = arith.constant 1 : index
    %c0_43 = arith.constant 0 : index
    %55 = vector.load %arg5[%c0_41, %c1_42, %c0_43] : memref<1x3x256xf32, #tpu.memory_space<vmem>>, vector<1x1x256xf32>
    %56 = vector.shape_cast %55 : vector<1x1x256xf32> to vector<1x256xf32>
    %57 = vector.shape_cast %54 : vector<1x256xf32> to vector<1x1x256xf32>
    tpu.vector_store %arg5[%c0_41, %c1_42, %c0_43], %57 {strides = array<i32>} : memref<1x3x256xf32, #tpu.memory_space<vmem>>, vector<1x1x256xf32>,
    %c0_44 = arith.constant 0 : index
    %c0_45 = arith.constant 0 : index
    %c0_46 = arith.constant 0 : index
    %58 = vector.load %arg4[%c0_44, %c0_45, %c0_46] : memref<1x4x256xf32, #tpu.memory_space<vmem>>, vector<1x1x256xf32>
    %59 = vector.shape_cast %58 : vector<1x1x256xf32> to vector<1x256xf32>
    %c2_47 = arith.constant 2 : index
    %c0_48 = arith.constant 0 : index
    %60 = memref.load %arg2[%c2_47, %c0_48] : memref<3x4xf32, #tpu.memory_space<smem>>
    %61 = vector.broadcast %60 : f32 to vector<1x256xf32>
    %62 = arith.mulf %59, %61 : vector<1x256xf32>
    %c0_49 = arith.constant 0 : index
    %c1_50 = arith.constant 1 : index
    %c0_51 = arith.constant 0 : index
    %63 = vector.load %arg4[%c0_49, %c1_50, %c0_51] : memref<1x4x256xf32, #tpu.memory_space<vmem>>, vector<1x1x256xf32>
    %64 = vector.shape_cast %63 : vector<1x1x256xf32> to vector<1x256xf32>
    %c2_52 = arith.constant 2 : index
    %c1_53 = arith.constant 1 : index
    %65 = memref.load %arg2[%c2_52, %c1_53] : memref<3x4xf32, #tpu.memory_space<smem>>
    %66 = vector.broadcast %65 : f32 to vector<1x256xf32>
    %67 = arith.mulf %64, %66 : vector<1x256xf32>
    %68 = arith.addf %62, %67 : vector<1x256xf32>
    %c0_54 = arith.constant 0 : index
    %c2_55 = arith.constant 2 : index
    %c0_56 = arith.constant 0 : index
    %69 = vector.load %arg4[%c0_54, %c2_55, %c0_56] : memref<1x4x256xf32, #tpu.memory_space<vmem>>, vector<1x1x256xf32>
    %70 = vector.shape_cast %69 : vector<1x1x256xf32> to vector<1x256xf32>
    %c2_57 = arith.constant 2 : index
    %c2_58 = arith.constant 2 : index
    %71 = memref.load %arg2[%c2_57, %c2_58] : memref<3x4xf32, #tpu.memory_space<smem>>
    %72 = vector.broadcast %71 : f32 to vector<1x256xf32>
    %73 = arith.mulf %70, %72 : vector<1x256xf32>
    %74 = arith.addf %68, %73 : vector<1x256xf32>
    %c0_59 = arith.constant 0 : index
    %c3_60 = arith.constant 3 : index
    %c0_61 = arith.constant 0 : index
    %75 = vector.load %arg4[%c0_59, %c3_60, %c0_61] : memref<1x4x256xf32, #tpu.memory_space<vmem>>, vector<1x1x256xf32>
    %76 = vector.shape_cast %75 : vector<1x1x256xf32> to vector<1x256xf32>
    %c2_62 = arith.constant 2 : index
    %c3_63 = arith.constant 3 : index
    %77 = memref.load %arg2[%c2_62, %c3_63] : memref<3x4xf32, #tpu.memory_space<smem>>
    %78 = vector.broadcast %77 : f32 to vector<1x256xf32>
    %79 = arith.mulf %76, %78 : vector<1x256xf32>
    %80 = arith.addf %74, %79 : vector<1x256xf32>
    %c2_64 = arith.constant 2 : index
    %81 = memref.load %arg3[%c2_64] : memref<3xf32, #tpu.memory_space<smem>>
    %82 = vector.broadcast %81 : f32 to vector<1x256xf32>
    %83 = arith.addf %80, %82 : vector<1x256xf32>
    %c0_65 = arith.constant 0 : index
    %c2_66 = arith.constant 2 : index
    %c0_67 = arith.constant 0 : index
    %84 = vector.load %arg5[%c0_65, %c2_66, %c0_67] : memref<1x3x256xf32, #tpu.memory_space<vmem>>, vector<1x1x256xf32>
    %85 = vector.shape_cast %84 : vector<1x1x256xf32> to vector<1x256xf32>
    %86 = vector.shape_cast %83 : vector<1x256xf32> to vector<1x1x256xf32>
    tpu.vector_store %arg5[%c0_65, %c2_66, %c0_67], %86 {strides = array<i32>} : memref<1x3x256xf32, #tpu.memory_space<vmem>>, vector<1x1x256xf32>,
    return
  }
  func.func @transform_0(%arg0: i32, %arg1: i32) -> (i32, i32) {
    %c0_i32 = arith.constant 0 : i32
    %c0_i32_0 = arith.constant 0 : i32
    %c0_i32_1 = arith.constant 0 : i32
    return %c0_i32, %c0_i32_0 : i32, i32
  }
  func.func @transform_1(%arg0: i32, %arg1: i32) -> i32 {
    %c0_i32 = arith.constant 0 : i32
    %c0_i32_0 = arith.constant 0 : i32
    return %c0_i32 : i32
  }
  func.func @transform_2(%arg0: i32, %arg1: i32) -> (i32, i32, i32) {
    %c0_i32 = arith.constant 0 : i32
    %c0_i32_0 = arith.constant 0 : i32
    return %arg0, %c0_i32, %arg1 : i32, i32, i32
  }
  func.func @transform_3(%arg0: i32, %arg1: i32) -> (i32, i32, i32) {
    %c0_i32 = arith.constant 0 : i32
    %c0_i32_0 = arith.constant 0 : i32
    return %arg0, %c0_i32, %arg1 : i32, i32, i32
  }
}

</mosaic_0001>

<llo_original>
// kernel: tpu_custom_call.1
$region0: #{tpu_custom_call.1}
  #allocation0 [shape = 'u32[]', space=smem, size = 0x4, offset = 0x4, fixed_abs, tag = 'smem constant byte address 0x4 - core index']
  #allocation1 [shape = 'u32[72,128]{1,0:T(1,128)}', space=vmem, size = 0x9000, scoped, tag = 'internal scratch']
  %s0 = inlined_call_operand.hbm [shape: f32[3,4], index: 0, kind: input, shape index: {}]
  %s1 = inlined_call_operand.hbm [shape: f32[3], index: 1, kind: input, shape index: {}]
  %s2 = inlined_call_operand.hbm [shape: f32[2,4,256], index: 2, kind: input, shape index: {}]
  %s3 = inlined_call_operand.vmem [shape: f32[2,3,256], index: 3, kind: output, shape index: {}]
  %s4 = sld [smem:[#allocation0]]
  $region57: #{tpu_custom_call.1} parent=0
    _
  %s6 = ssub.s32 1, %s4
  %s7 = scalar_select 0, %s6, %s4
  $region1: #{tpu_custom_call.1} parent=0
    #allocation2 [shape = 'u8[2048]{0}', space=smem, size = 0x800, scoped, tag = 'input window, operand 0, single buffered']
    #allocation3 [shape = 's32[2]{0}', space=sflag, size = 0x8, scoped, tag = 'scoped memory for tpu_custom_call.1']
    #allocation4 [shape = 's32[2]{0}', space=sflag, size = 0x8, scoped, tag = 'scoped memory for tpu_custom_call.1']
    #allocation5 [shape = 'u8[512]{0}', space=smem, size = 0x200, scoped, tag = 'input window, operand 1, single buffered']
    #allocation6 [shape = 's32[1]{0}', space=sflag, size = 0x4, scoped, tag = 'scoped memory for tpu_custom_call.1']
    #allocation7 [shape = 'u8[8192]{0}', space=vmem, size = 0x2000, scoped, tag = 'input window, operand 2']
    %8 = vsyncpa [#allocation4], 0
    %9 = vsyncpa [#allocation6], 0
    %10 = vsyncpa [#allocation3], 0
    %s11 = scalar_lea.sflag [#allocation3], 1
    %12 = vsyncpa %s11, 0
    loop: start=0, step=1, limit=4
    $region2: #{tpu_custom_call.1} parent=1 // loop_pre_header
      _
    $region3: #{tpu_custom_call.1} parent=1 // loop_header
      %s14 = sphi 0, %s18
      %p15 = scmp.ge.s32.totalorder %s14, 4
      %s21 = sphi 0, %s33
      %s22 = sphi 0, %s29
      %s23 = sphi 0, %s21
      %s24 = sphi 0, %s22
      %s25 = sphi 0, %s23
      %s26 = sphi 0, %s24
      %s34 = sphi 0, %s34
      %s36 = sphi 0, %s34
      %s37 = sphi 0, %s36
      %s51 = sphi 0, %s37
      %s55 = sphi 0, %s55
      %s57 = sphi 0, %s55
      %s58 = sphi 0, %s57
      %s72 = sphi 0, %s58
      %s80 = sphi 0, %s82
      %s83 = sphi 0, %s80
      %s84 = sphi 0, %s83
      %s100 = sphi 0, %s84
      %s108 = sphi 0, %s110
      %s111 = sphi 0, %s108
      %s112 = sphi 0, %s111
      %s128 = sphi 0, %s112
    $region4: #{tpu_custom_call.1} parent=1 // loop_header_branch
      %17 = sbr.rel (%p15) target = $region8
    $region5: #{tpu_custom_call.1} parent=1 // loop_body
      %s19 = ssub.s32 %s14, 1
      %s20 = ssub.s32 %s14, 2
      %s27 = sadd.s32 1, %s22
      %p28 = scmp.ge.s32.totalorder %s27, 1
      %s29 = scalar_select %p28, 0, %s27
      %s30 = sadd.s32 1, %s21
      %s31 = scalar_select %p28, %s30, %s21
      %p32 = scmp.ge.s32.totalorder %s31, 2
      %s33 = scalar_select %p32, 0, %s31
      %s35 = sadd.s32 %s34, 1
      %p38 = scmp.eq.s32.totalorder %s14, 1
      %p39 = scmp.ne.s32.totalorder %s34, %s36
      %p40 = scmp.eq.s32.totalorder %s14, 0
      %p41 = por %p39, %p40
      %p42 = scmp.ne.s32.totalorder %s34, %s36
      %p43 = scmp.eq.s32.totalorder %s19, 1
      %p44 = por %p42, %p43
      %p45 = scmp.ne.s32.totalorder %s36, %s37
      %p46 = scmp.eq.s32.totalorder %s19, 0
      %p47 = por %p45, %p46
      %p48 = scmp.ne.s32.totalorder %s36, %s37
      %p49 = scmp.eq.s32.totalorder %s20, 1
      %p50 = por %p48, %p49
      %p52 = scmp.ne.s32.totalorder %s37, %s51
      %p53 = scmp.eq.s32.totalorder %s20, 0
      %p54 = por %p52, %p53
      %s56 = sadd.s32 %s55, 1
      %p59 = scmp.eq.s32.totalorder %s14, 1
      %p60 = scmp.ne.s32.totalorder %s55, %s57
      %p61 = scmp.eq.s32.totalorder %s14, 0
      %p62 = por %p60, %p61
      %p63 = scmp.ne.s32.totalorder %s55, %s57
      %p64 = scmp.eq.s32.totalorder %s19, 1
      %p65 = por %p63, %p64
      %p66 = scmp.ne.s32.totalorder %s57, %s58
      %p67 = scmp.eq.s32.totalorder %s19, 0
      %p68 = por %p66, %p67
      %p69 = scmp.ne.s32.totalorder %s57, %s58
      %p70 = scmp.eq.s32.totalorder %s20, 1
      %p71 = por %p69, %p70
      %p73 = scmp.ne.s32.totalorder %s58, %s72
      %p74 = scmp.eq.s32.totalorder %s20, 0
      %p75 = por %p73, %p74
      %s76 = ssub.s32 %s21, %s33
      %s77 = ssub.s32 %s22, %s29
      %s78 = sor.u32 %s76, %s77
      %p79 = scmp.eq.s32.totalorder %s78, 0
      %s81 = sadd.s32 %s80, 1
      %s82 = scalar_select %p79, %s80, %s81
      %p85 = pneg %p79
      %p86 = scmp.eq.s32.totalorder %s14, 1
      %p87 = por %p85, %p86
      %p88 = scmp.ne.s32.totalorder %s80, %s83
      %p89 = scmp.eq.s32.totalorder %s14, 0
      %p90 = por %p88, %p89
      %p91 = scmp.ne.s32.totalorder %s80, %s83
      %p92 = scmp.eq.s32.totalorder %s19, 1
      %p93 = por %p91, %p92
      %p94 = scmp.ne.s32.totalorder %s83, %s84
      %p95 = scmp.eq.s32.totalorder %s19, 0
      %p96 = por %p94, %p95
      %p97 = scmp.ne.s32.totalorder %s83, %s84
      %p98 = scmp.eq.s32.totalorder %s20, 1
      %p99 = por %p97, %p98
      %p101 = scmp.ne.s32.totalorder %s84, %s100
      %p102 = scmp.eq.s32.totalorder %s20, 0
      %p103 = por %p101, %p102
      %s104 = ssub.s32 %s21, %s33
      %s105 = ssub.s32 %s22, %s29
      %s106 = sor.u32 %s104, %s105
      %p107 = scmp.eq.s32.totalorder %s106, 0
      %s109 = sadd.s32 %s108, 1
      %s110 = scalar_select %p107, %s108, %s109
      %p113 = pneg %p107
      %p114 = scmp.eq.s32.totalorder %s14, 1
      %p115 = por %p113, %p114
      %p116 = scmp.ne.s32.totalorder %s108, %s111
      %p117 = scmp.eq.s32.totalorder %s14, 0
      %p118 = por %p116, %p117
      %p119 = scmp.ne.s32.totalorder %s108, %s111
      %p120 = scmp.eq.s32.totalorder %s19, 1
      %p121 = por %p119, %p120
      %p122 = scmp.ne.s32.totalorder %s111, %s112
      %p123 = scmp.eq.s32.totalorder %s19, 0
      %p124 = por %p122, %p123
      %p125 = scmp.ne.s32.totalorder %s111, %s112
      %p126 = scmp.eq.s32.totalorder %s20, 1
      %p127 = por %p125, %p126
      %p129 = scmp.ne.s32.totalorder %s112, %s128
      %p130 = scmp.eq.s32.totalorder %s20, 0
      %p131 = por %p129, %p130
      %p132 = scmp.le.s32.totalorder 1, %s14
      %p133 = scmp.lt.s32.totalorder %s14, 3
      %p134 = pnand %p132, %p133
      %p135 = pneg %p134
      // Predicated region
      $region9: #{tpu_custom_call.1} parent=5 // pred_check
        _
      $region10: #{tpu_custom_call.1} parent=5 // pred_check_branch
        %137 = sbr.rel (%p134) target = $region12
      $region11: #{tpu_custom_call.1} parent=5 // pred_region
        %s138 = ssub.s32 %s14, 1
        // Predicated region
        $region13: #{tpu_custom_call.1} parent=11 // pred_check
          %p139 = pneg %p47
        $region14: #{tpu_custom_call.1} parent=11 // pred_check_branch
          %141 = sbr.rel (%p139) target = $region16
        $region15: #{tpu_custom_call.1} parent=11 // pred_region
          %143 = vsyncadd [#allocation4], 0
          %s145 = sshll.u32 %s0, 4
          %s146 = int_to_ptr.hbm [resolvable:$true] %s145
          %148 = dma.hbm_to_smem %s146, 64, [#allocation2], [#allocation4]
        $region16: #{tpu_custom_call.1} parent=11 // pred_fallthru
          _
        // Predicated region
        $region17: #{tpu_custom_call.1} parent=11 // pred_check
          %p149 = pneg %p68
        $region18: #{tpu_custom_call.1} parent=11 // pred_check_branch
          %151 = sbr.rel (%p149) target = $region20
        $region19: #{tpu_custom_call.1} parent=11 // pred_region
          %153 = vsyncadd [#allocation6], 0
          %s155 = sshll.u32 %s1, 4
          %s156 = int_to_ptr.hbm [resolvable:$true] %s155
          %158 = dma.hbm_to_smem %s156, 16, [#allocation5], [#allocation6]
        $region20: #{tpu_custom_call.1} parent=11 // pred_fallthru
          _
      $region12: #{tpu_custom_call.1} parent=5 // pred_fallthru
        _
      %p159 = scmp.lt.s32.totalorder %s14, 2
      // Predicated region
      $region21: #{tpu_custom_call.1} parent=5 // pred_check
        %p160 = pneg %p159
      $region22: #{tpu_custom_call.1} parent=5 // pred_check_branch
        %162 = sbr.rel (%p160) target = $region24
      $region23: #{tpu_custom_call.1} parent=5 // pred_region
        // Predicated region
        $region25: #{tpu_custom_call.1} parent=23 // pred_check
          %p163 = pneg %p90
        $region26: #{tpu_custom_call.1} parent=23 // pred_check_branch
          %165 = sbr.rel (%p163) target = $region28
        $region27: #{tpu_custom_call.1} parent=23 // pred_region
          %s166 = sand.u32 %s80, 1
          %s167 = scalar_lea.sflag [#allocation3], %s166
          %s168 = sand.u32 %s80, 1
          %s169 = smul.addr %s168, 8
          %s170 = scalar_lea.vmem [#allocation7], %s169
          %s171 = smul.u32 2, %s22
          %173 = vsyncadd %s167, 0
          %s174 = smul.addr %s21, 2
          %s175 = sadd.s32 %s171, %s174
          %s176 = smul.addr %s175, 4
          %s177 = scalar_lea.hbm %s2, %s176
          %s179 = sshll.u32 %s177, 4
          %s180 = int_to_ptr.hbm [resolvable:$true] %s179
          %s181 = sshll.u32 %s170, 4
          %s182 = int_to_ptr.vmem [resolvable:$true] %s181
          %184 = dma.hbm_to_vmem [thread:$0]  %s180, 128, %s182, %s167
        $region28: #{tpu_custom_call.1} parent=23 // pred_fallthru
          _
      $region24: #{tpu_custom_call.1} parent=5 // pred_fallthru
        _
      %p185 = scmp.le.s32.totalorder 1, %s14
      %p186 = scmp.lt.s32.totalorder %s14, 3
      %p187 = pnand %p185, %p186
      %p188 = pneg %p187
      // Predicated region
      $region29: #{tpu_custom_call.1} parent=5 // pred_check
        _
      $region30: #{tpu_custom_call.1} parent=5 // pred_check_branch
        %190 = sbr.rel (%p187) target = $region32
      $region31: #{tpu_custom_call.1} parent=5 // pred_region
        %s191 = ssub.s32 %s14, 1
        // Predicated region
        $region33: #{tpu_custom_call.1} parent=31 // pred_check
          %p192 = pneg %p47
        $region34: #{tpu_custom_call.1} parent=31 // pred_check_branch
          %194 = sbr.rel (%p192) target = $region36
        $region35: #{tpu_custom_call.1} parent=31 // pred_region
          %196 = dma.done [#allocation4], 64
        $region36: #{tpu_custom_call.1} parent=31 // pred_fallthru
          _
        // Predicated region
        $region37: #{tpu_custom_call.1} parent=31 // pred_check
          %p197 = pneg %p68
        $region38: #{tpu_custom_call.1} parent=31 // pred_check_branch
          %199 = sbr.rel (%p197) target = $region40
        $region39: #{tpu_custom_call.1} parent=31 // pred_region
          %201 = dma.done [#allocation6], 16
        $region40: #{tpu_custom_call.1} parent=31 // pred_fallthru
          _
        %s202 = sand.u32 %s83, 1
        %s203 = scalar_lea.sflag [#allocation3], %s202
        %s204 = sand.u32 %s83, 1
        %s205 = smul.addr %s204, 8
        %s206 = scalar_lea.vmem [#allocation7], %s205
        // Predicated region
        $region41: #{tpu_custom_call.1} parent=31 // pred_check
          %p207 = pneg %p96
        $region42: #{tpu_custom_call.1} parent=31 // pred_check_branch
          %209 = sbr.rel (%p207) target = $region44
        $region43: #{tpu_custom_call.1} parent=31 // pred_region
          %211 = dma.done %s203, 128
        $region44: #{tpu_custom_call.1} parent=31 // pred_fallthru
          _
        %212 = sfence
        %p213 = pneg %p47
        %p214 = pneg %p44
        %p215 = pneg %p68
        %p216 = pneg %p65
        %s217 = sand.u32 %s83, 1
        %s218 = scalar_lea.sflag [#allocation3], %s217
        %s219 = sand.u32 %s83, 1
        %s220 = smul.addr %s219, 8
        %s221 = scalar_lea.vmem [#allocation7], %s220
        %p222 = pneg %p96
        %p223 = pneg %p93
        %p224 = pneg %p124
        %p225 = pneg %p121
        %s226 = smul.u32 2, %s24
        %p227 = scmp.lt.s32.totalorder %s23, 1
        %s228 = scalar_select %p227, %s23, 1
        %p229 = scmp.lt.s32.totalorder %s226, 1
        %s230 = scalar_select %p229, %s226, 1
        %s231 = smul.addr %s228, 2
        %s232 = sadd.s32 %s230, %s231
        %s233 = smul.addr %s232, 4
        %s234 = scalar_lea.vmem %s3, %s233
        %s235 = smul.u32 2, %s24
        %s236 = smul.u32 2, %s24
        %p237 = scmp.lt.s32.totalorder %s23, 1
        %s238 = scalar_select %p237, %s23, 1
        %p239 = scmp.lt.s32.totalorder %s236, 1
        %s240 = scalar_select %p239, %s236, 1
        %s241 = smul.addr %s238, 2
        %s242 = sadd.s32 %s240, %s241
        %s243 = smul.addr %s242, 4
        %s244 = scalar_lea.vmem %s3, %s243
        %s245 = smul.u32 2, %s24
        %v246 = vld [vmem:[%s206] ss:$4 sm:$0x3]
        %s247 = sld [smem:[#allocation2]]
        %v248 = vstv %s247
        %v249 = vmul.f32 %v246, %v248
        %s250 = scalar_lea.vmem %s206, 1 [#allocation7]
        %v251 = vld [vmem:[%s250] ss:$4 sm:$0x3]
        %s252 = sld [smem:[#allocation2 + $0x1]]
        %v253 = vstv %s252
        %v254 = vmul.f32 %v251, %v253
        %v255 = vadd.f32 %v249, %v254
        %s256 = scalar_lea.vmem %s206, 2 [#allocation7]
        %v257 = vld [vmem:[%s256] ss:$4 sm:$0x3]
        %s258 = sld [smem:[#allocation2 + $0x2]]
        %v259 = vstv %s258
        %v260 = vmul.f32 %v257, %v259
        %v261 = vadd.f32 %v255, %v260
        %s262 = scalar_lea.vmem %s206, 3 [#allocation7]
        %v263 = vld [vmem:[%s262] ss:$4 sm:$0x3]
        %s264 = sld [smem:[#allocation2 + $0x3]]
        %v265 = vstv %s264
        %v266 = vmul.f32 %v263, %v265
        %v267 = vadd.f32 %v261, %v266
        %s268 = sld [smem:[#allocation5]]
        %v269 = vstv %s268
        %v270 = vadd.f32 %v267, %v269
        %v271 = vlaneseq
        %vm272 = vcmp.ge.s32.totalorder %v271, 0
        %vm273 = vcmp.lt.s32.totalorder %v271, 256
        %vm274 = vmand %vm272, %vm273
        %275 = vst.msk [vmem:[%s244] ss:$4 sm:$0x3] %vm274, %v270
        %v276 = vld [vmem:[%s206] ss:$4 sm:$0x3]
        %s277 = sld [smem:[#allocation2 + $0x80]]
        %v278 = vstv %s277
        %v279 = vmul.f32 %v276, %v278
        %v280 = vld [vmem:[%s250] ss:$4 sm:$0x3]
        %s281 = sld [smem:[#allocation2 + $0x81]]
        %v282 = vstv %s281
        %v283 = vmul.f32 %v280, %v282
        %v284 = vadd.f32 %v279, %v283
        %v285 = vld [vmem:[%s256] ss:$4 sm:$0x3]
        %s286 = sld [smem:[#allocation2 + $0x82]]
        %v287 = vstv %s286
        %v288 = vmul.f32 %v285, %v287
        %v289 = vadd.f32 %v284, %v288
        %v290 = vld [vmem:[%s262] ss:$4 sm:$0x3]
        %s291 = sld [smem:[#allocation2 + $0x83]]
        %v292 = vstv %s291
        %v293 = vmul.f32 %v290, %v292
        %v294 = vadd.f32 %v289, %v293
        %s295 = sld [smem:[#allocation5 + $0x1]]
        %v296 = vstv %s295
        %v297 = vadd.f32 %v294, %v296
        %s298 = scalar_lea.vmem %s244, 1
        %299 = vst.msk [vmem:[%s298] ss:$4 sm:$0x3] %vm274, %v297
        %v300 = vld [vmem:[%s206] ss:$4 sm:$0x3]
        %s301 = sld [smem:[#allocation2 + $0x100]]
        %v302 = vstv %s301
        %v303 = vmul.f32 %v300, %v302
        %v304 = vld [vmem:[%s250] ss:$4 sm:$0x3]
        %s305 = sld [smem:[#allocation2 + $0x101]]
        %v306 = vstv %s305
        %v307 = vmul.f32 %v304, %v306
        %v308 = vadd.f32 %v303, %v307
        %v309 = vld [vmem:[%s256] ss:$4 sm:$0x3]
        %s310 = sld [smem:[#allocation2 + $0x102]]
        %v311 = vstv %s310
        %v312 = vmul.f32 %v309, %v311
        %v313 = vadd.f32 %v308, %v312
        %v314 = vld [vmem:[%s262] ss:$4 sm:$0x3]
        %s315 = sld [smem:[#allocation2 + $0x103]]
        %v316 = vstv %s315
        %v317 = vmul.f32 %v314, %v316
        %v318 = vadd.f32 %v313, %v317
        %s319 = sld [smem:[#allocation5 + $0x2]]
        %v320 = vstv %s319
        %v321 = vadd.f32 %v318, %v320
        %s322 = scalar_lea.vmem %s244, 2
        %323 = vst.msk [vmem:[%s322] ss:$4 sm:$0x3] %vm274, %v321
        %s324 = smul.u32 2, %s24
        %p325 = scmp.lt.s32.totalorder %s23, 1
        %s326 = scalar_select %p325, %s23, 1
        %p327 = scmp.lt.s32.totalorder %s324, 1
        %s328 = scalar_select %p327, %s324, 1
        %s329 = smul.addr %s326, 2
        %s330 = sadd.s32 %s328, %s329
        %s331 = smul.addr %s330, 4
        %s332 = scalar_lea.vmem %s3, %s331
        // Predicated region
        $region45: #{tpu_custom_call.1} parent=31 // pred_check
          %p333 = pneg %p121
        $region46: #{tpu_custom_call.1} parent=31 // pred_check_branch
          %335 = sbr.rel (%p333) target = $region48
        $region47: #{tpu_custom_call.1} parent=31 // pred_region
          %s336 = smul.u32 2, %s24
        $region48: #{tpu_custom_call.1} parent=31 // pred_fallthru
          _
      $region32: #{tpu_custom_call.1} parent=5 // pred_fallthru
        _
      %p337 = scmp.le.s32.totalorder 2, %s14
      // Predicated region
      $region49: #{tpu_custom_call.1} parent=5 // pred_check
        %p338 = pneg %p337
      $region50: #{tpu_custom_call.1} parent=5 // pred_check_branch
        %340 = sbr.rel (%p338) target = $region52
      $region51: #{tpu_custom_call.1} parent=5 // pred_region
        %s341 = ssub.s32 %s14, 2
        // Predicated region
        $region53: #{tpu_custom_call.1} parent=51 // pred_check
          %p342 = pneg %p127
        $region54: #{tpu_custom_call.1} parent=51 // pred_check_branch
          %344 = sbr.rel (%p342) target = $region56
        $region55: #{tpu_custom_call.1} parent=51 // pred_region
          %s345 = smul.u32 2, %s26
          %p346 = scmp.lt.s32.totalorder %s25, 1
          %s347 = scalar_select %p346, %s25, 1
          %p348 = scmp.lt.s32.totalorder %s345, 1
          %s349 = scalar_select %p348, %s345, 1
          %s350 = smul.addr %s347, 2
          %s351 = sadd.s32 %s349, %s350
          %s352 = smul.addr %s351, 4
          %s353 = scalar_lea.vmem %s3, %s352
        $region56: #{tpu_custom_call.1} parent=51 // pred_fallthru
          _
      $region52: #{tpu_custom_call.1} parent=5 // pred_fallthru
        _
    $region6: #{tpu_custom_call.1} parent=1 // loop_footer
      %s18 = sadd.s32 1, %s14
    $region7: #{tpu_custom_call.1} parent=1 // loop_footer_branch
      %13 = sbr.rel target = $region3
    $region8: #{tpu_custom_call.1} parent=1 // loop_exit
      _
    %354 = vsyncpa [#allocation3], 1
    %s355 = scalar_lea.sflag [#allocation3], 1
    %356 = vsyncpa %s355, 1
    %357 = vsyncpa [#allocation4], 1
    %s358 = scalar_lea.sflag [#allocation4], 1
    %359 = vsyncpa %s358, 1
    %360 = vsyncpa [#allocation6], 1

</llo_original>
